<compile_context>
chip_gen: v7x
topology: tpu7x:2x2x1
jax: 0.10.0
libtpu: 0.0.40
codegen_flags: <defaults>
</compile_context>

<pallas_src>
import functools

import jax
import jax.numpy as jnp
from jax import lax
from jax.experimental import pallas as pl
from jax.experimental.pallas import tpu as pltpu


def _round_up(x, m):
    return (x + m - 1) // m * m


def _pick_tile_128(dim, target):
    """Largest divisor of `dim` that is a multiple of 128 and <= target.

    `dim` is always a multiple of 128 here, so this terminates at >= 128.
    """
    t = min(dim, max(128, (target // 128) * 128))
    while dim % t != 0:
        t -= 128
    return t


# ---------------------------------------------------------------------------
# Kernel 1: tiled matmul + bias  (hoisted input projection and decoder).
#   grid = (M//tm, N//tn, K//tk); f32 VMEM accumulator; bf16 MXU operands.
# ---------------------------------------------------------------------------
def matmul_bias_kernel(x_ref, w_ref, b_ref, o_ref, acc_ref):
    k = pl.program_id(2)

    @pl.when(k == 0)
    def _():
        acc_ref[...] = jnp.zeros_like(acc_ref)

    acc_ref[...] += jnp.dot(
        x_ref[...].astype(jnp.bfloat16),      # bf16 MXU operands,
        w_ref[...],                           # weights already stored bf16,
        preferred_element_type=jnp.float32,   # f32 accumulation.
    )

    @pl.when(k == pl.num_programs(2) - 1)
    def _():
        o_ref[...] = (acc_ref[...] + b_ref[...]).astype(o_ref.dtype)


def matmul_bias(x, w_bf16, b, *, tm_target=256, tn_target=256, tk_target=512):
    """(M, K) f32 @ (K, N) bf16 + (1, N) f32 -> (M, N) f32, tiled & pipelined."""
    M, K = x.shape
    N = w_bf16.shape[1]

    if M <= tm_target:
        tm = _round_up(M, 8)
    else:
        tm = tm_target
    m_pad = _round_up(M, tm)
    if m_pad != M:
        x = jnp.pad(x, ((0, m_pad - M), (0, 0)))

    tn = _pick_tile_128(N, tn_target)
    tk = _pick_tile_128(K, tk_target)
    grid = (m_pad // tm, N // tn, K // tk)

    out = pl.pallas_call(
        matmul_bias_kernel,
        out_shape=jax.ShapeDtypeStruct((m_pad, N), jnp.float32),
        grid_spec=pltpu.PrefetchScalarGridSpec(
            num_scalar_prefetch=0,
            grid=grid,
            in_specs=[
                pl.BlockSpec((tm, tk), lambda i, j, k: (i, k)),
                pl.BlockSpec((tk, tn), lambda i, j, k: (k, j)),
                pl.BlockSpec((1, tn), lambda i, j, k: (0, j)),
            ],
            out_specs=pl.BlockSpec((tm, tn), lambda i, j, k: (i, j)),
            scratch_shapes=[pltpu.VMEM((tm, tn), jnp.float32)],
        ),
        compiler_params=pltpu.CompilerParams(
            dimension_semantics=("parallel", "parallel", "arbitrary"),
        ),
    )(x, w_bf16, b)
    return out[:M] if m_pad != M else out


# ---------------------------------------------------------------------------
# Kernel 2: recurrent tanh RNN over time.
#   grid = (batch_blocks [parallel], time_blocks [arbitrary]).
#   Only h_{t-1} @ W_hh + pre_t and tanh run per step; pre_t = x_t@W_ih + b is
#   precomputed.  Hidden state lives in the resident hN output block.
# ---------------------------------------------------------------------------
def rnn_recurrence_kernel(pre_ref, h0_ref, whh_ref, out_ref, hN_ref, *, t_blk):
    tb = pl.program_id(1)

    @pl.when(tb == 0)
    def _():
        hN_ref[...] = h0_ref[...]

    whh = whh_ref[...]                      # (nhid_p, nhid_p) bf16, loop-invariant

    def step(i, h):
        pre_t = pre_ref[i]                  # (b_blk, nhid_p) f32
        h_new = jnp.tanh(
            pre_t
            + jnp.dot(h.astype(jnp.bfloat16), whh,
                      preferred_element_type=jnp.float32)
        )
        out_ref[i] = h_new
        return h_new

    hN_ref[...] = lax.fori_loop(0, t_blk, step, hN_ref[...], unroll=True)


def run_rnn(pre, h0, w_hh_bf16):
    seq, batch_p, nhid_p = pre.shape

    # Time blocking: largest divisor of seq up to 32 steps per grid iteration.
    t_blk = 1
    for cand in (32, 16, 8, 4, 2, 1):
        if seq % cand == 0:
            t_blk = cand
            break

    # Batch blocking: split across the 2 TensorCores (v7x) when batch allows.
    b_blk = batch_p // 2 if batch_p % 16 == 0 else batch_p
    grid = (batch_p // b_blk, seq // t_blk)

    kernel = functools.partial(rnn_recurrence_kernel, t_blk=t_blk)
    out_shape = (
        jax.ShapeDtypeStruct((seq, batch_p, nhid_p), jnp.float32),
        jax.ShapeDtypeStruct((batch_p, nhid_p), jnp.float32),
    )
    grid_spec = pltpu.PrefetchScalarGridSpec(
        num_scalar_prefetch=0,
        grid=grid,
        in_specs=[
            pl.BlockSpec((t_blk, b_blk, nhid_p), lambda bb, tb: (tb, bb, 0)),
            pl.BlockSpec((b_blk, nhid_p), lambda bb, tb: (bb, 0)),
            pl.BlockSpec((nhid_p, nhid_p), lambda bb, tb: (0, 0)),
        ],
        out_specs=[
            pl.BlockSpec((t_blk, b_blk, nhid_p), lambda bb, tb: (tb, bb, 0)),
            # Constant along the time axis -> resident running hidden state.
            pl.BlockSpec((b_blk, nhid_p), lambda bb, tb: (bb, 0)),
        ],
    )
    return pl.pallas_call(
        kernel,
        out_shape=out_shape,
        grid_spec=grid_spec,
        compiler_params=pltpu.CompilerParams(
            dimension_semantics=("parallel", "arbitrary"),
        ),
    )(pre, h0, w_hh_bf16)


# ---------------------------------------------------------------------------
# Full RNNModel forward (inference mode).
# ---------------------------------------------------------------------------
def rnn_model_forward(tokens, hidden, params):
    seq, batch = tokens.shape
    nhid = params["nhid"]
    ntoken = params["ntoken"]
    nhid_p = params["w_hh_p"].shape[0]
    ntoken_p = params["decoder_weight_t_p"].shape[1]
    ninp_p = params["encoder_weight_p"].shape[1]
    batch_p = _round_up(max(batch, 8), 8)

    # Encoder: embedding gather (plain JAX glue). Dropout layers are identity
    # in eval mode.
    emb = params["encoder_weight_p"][tokens]                  # (seq, batch, ninp_p)
    emb = jnp.pad(emb, ((0, 0), (0, batch_p - batch), (0, 0)))

    # Hoisted input projection for ALL timesteps: one large MXU matmul.
    pre = matmul_bias(
        emb.reshape(seq * batch_p, ninp_p),
        params["w_ih_p"], params["b_rnn_p"],
    ).reshape(seq, batch_p, nhid_p)

    # Recurrent tanh RNN over time.
    h0 = jnp.zeros((batch_p, nhid_p), jnp.float32).at[:batch, :nhid].set(hidden)
    out, hN = run_rnn(pre, h0, params["w_hh_p"])

    # Decoder linear on the flattened (seq*batch_p, nhid_p) activations.
    decoded_p = matmul_bias(
        out.reshape(seq * batch_p, nhid_p),
        params["decoder_weight_t_p"], params["decoder_bias_p"],
    ).reshape(seq, batch_p, ntoken_p)

    decoded = decoded_p[:, :batch, :ntoken]
    hidden_out = hN[:batch, :nhid]
    return decoded, hidden_out


def init_params(key, ntoken, ninp, nhid):
    initrange = 0.1
    ninp_p = _round_up(ninp, 128)
    nhid_p = _round_up(nhid, 128)
    ntoken_p = _round_up(ntoken, 128)

    k1, k2, k3, k4 = jax.random.split(key, 4)
    encoder_weight = jax.random.uniform(
        k1, (ntoken, ninp), jnp.float32, -initrange, initrange)
    decoder_weight = jax.random.uniform(
        k2, (ntoken, nhid), jnp.float32, -initrange, initrange)
    w_ih = jax.random.uniform(k3, (ninp, nhid), jnp.float32, -initrange, initrange)
    w_hh = jax.random.uniform(k4, (nhid, nhid), jnp.float32, -initrange, initrange)

    # Lane-dense zero-padded copies; matmul weights stored bf16 for the MXU.
    enc_p = jnp.zeros((ntoken, ninp_p), jnp.float32).at[:, :ninp].set(encoder_weight)
    w_ih_p = (jnp.zeros((ninp_p, nhid_p), jnp.float32)
              .at[:ninp, :nhid].set(w_ih).astype(jnp.bfloat16))
    w_hh_p = (jnp.zeros((nhid_p, nhid_p), jnp.float32)
              .at[:nhid, :nhid].set(w_hh).astype(jnp.bfloat16))
    b_rnn_p = jnp.zeros((1, nhid_p), jnp.float32)             # RNN cell bias (zero)
    dec_t_p = (jnp.zeros((nhid_p, ntoken_p), jnp.float32)
               .at[:nhid, :ntoken].set(decoder_weight.T).astype(jnp.bfloat16))
    dec_b_p = jnp.zeros((1, ntoken_p), jnp.float32)           # decoder.bias zeroed

    return {
        "encoder_weight_p": enc_p,
        "w_ih_p": w_ih_p,
        "w_hh_p": w_hh_p,
        "b_rnn_p": b_rnn_p,
        "decoder_weight_t_p": dec_t_p,
        "decoder_bias_p": dec_b_p,
        "nhid": nhid,
        "ntoken": ntoken,
    }


if __name__ == "__main__":
    ntoken, ninp, nhid = 64, 32, 32
    seq, batch = 8, 4

    key = jax.random.PRNGKey(0)
    kp, kt = jax.random.split(key)
    params = init_params(kp, ntoken, ninp, nhid)

    tokens = jax.random.randint(kt, (seq, batch), 0, ntoken, dtype=jnp.int32)
    hidden0 = jnp.zeros((batch, nhid), jnp.float32)           # init_hidden(bsz)

    decoded, hidden_out = rnn_model_forward(tokens, hidden0, params)
    jax.block_until_ready((decoded, hidden_out))

    assert decoded.shape == (seq, batch, ntoken)
    assert hidden_out.shape == (batch, nhid)
    print("KERNEL_OK")
</pallas_src>

<mosaic_0001>
module attributes {stable_mosaic.version = 11 : i64} {
  func.func @matmul_bias_kernel(%arg0: i32, %arg1: i32, %arg2: i32, %arg3: memref<64x128xf32, #tpu.memory_space<vmem>>, %arg4: memref<128x128xbf16, #tpu.memory_space<vmem>>, %arg5: memref<1x128xf32, #tpu.memory_space<vmem>>, %arg6: memref<64x128xf32, #tpu.memory_space<vmem>>, %arg7: memref<64x128xf32, #tpu.memory_space<vmem>>) attributes {dimension_semantics = [#tpu.dimension_semantics<parallel>, #tpu.dimension_semantics<parallel>, #tpu.dimension_semantics<arbitrary>], iteration_bounds = array<i64: 1, 1, 1>, scalar_prefetch = 0 : i64, scratch_operands = 1 : i64, tpu.core_type = #tpu.core_type<tc>, window_params = [{transform_indices = @transform_0, window_bounds = array<i64: 64, 128>}, {transform_indices = @transform_1, window_bounds = array<i64: 128, 128>}, {transform_indices = @transform_2, window_bounds = array<i64: 1, 128>}, {transform_indices = @transform_3, window_bounds = array<i64: 64, 128>}]} {
    %c0_i32 = arith.constant 0 : i32
    %0 = arith.cmpi eq, %arg2, %c0_i32 : i32
    %1 = arith.extui %0 : i1 to i32
    %c0_i32_0 = arith.constant 0 : i32
    %2 = arith.cmpi ne, %1, %c0_i32_0 : i32
    scf.if %2 {
      %cst_10 = arith.constant 0.000000e+00 : f32
      %13 = vector.broadcast %cst_10 : f32 to vector<64x128xf32>
      %c0_11 = arith.constant 0 : index
      %c0_12 = arith.constant 0 : index
      %14 = vector.load %arg7[%c0_11, %c0_12] : memref<64x128xf32, #tpu.memory_space<vmem>>, vector<64x128xf32>
      tpu.vector_store %arg7[%c0_11, %c0_12], %13 {strides = array<i32>} : memref<64x128xf32, #tpu.memory_space<vmem>>, vector<64x128xf32>,
    } else {
    }
    %c0 = arith.constant 0 : index
    %c0_1 = arith.constant 0 : index
    %3 = vector.load %arg7[%c0, %c0_1] : memref<64x128xf32, #tpu.memory_space<vmem>>, vector<64x128xf32>
    %c0_2 = arith.constant 0 : index
    %c0_3 = arith.constant 0 : index
    %4 = vector.load %arg3[%c0_2, %c0_3] : memref<64x128xf32, #tpu.memory_space<vmem>>, vector<64x128xf32>
    %5 = arith.truncf %4 : vector<64x128xf32> to vector<64x128xbf16>
    %c0_4 = arith.constant 0 : index
    %c0_5 = arith.constant 0 : index
    %6 = vector.load %arg4[%c0_4, %c0_5] : memref<128x128xbf16, #tpu.memory_space<vmem>>, vector<128x128xbf16>
    %cst = arith.constant dense<0.000000e+00> : vector<64x128xf32>
    %7 = tpu.matmul %5, %6, %cst {dimension_numbers = #tpu.dot_dimension_numbers<[1], [0], [0], [1], [0, 0, 1, 1], [], []>} : vector<64x128xbf16>, vector<128x128xbf16>, vector<64x128xf32> -> vector<64x128xf32>
    %8 = arith.addf %3, %7 : vector<64x128xf32>
    %c0_6 = arith.constant 0 : index
    %c0_7 = arith.constant 0 : index
    %9 = vector.load %arg7[%c0_6, %c0_7] : memref<64x128xf32, #tpu.memory_space<vmem>>, vector<64x128xf32>
    tpu.vector_store %arg7[%c0_6, %c0_7], %8 {strides = array<i32>} : memref<64x128xf32, #tpu.memory_space<vmem>>, vector<64x128xf32>,
    %c0_i32_8 = arith.constant 0 : i32
    %10 = arith.cmpi eq, %arg2, %c0_i32_8 : i32
    %11 = arith.extui %10 : i1 to i32
    %c0_i32_9 = arith.constant 0 : i32
    %12 = arith.cmpi ne, %11, %c0_i32_9 : i32
    scf.if %12 {
      %c0_10 = arith.constant 0 : index
      %c0_11 = arith.constant 0 : index
      %13 = vector.load %arg7[%c0_10, %c0_11] : memref<64x128xf32, #tpu.memory_space<vmem>>, vector<64x128xf32>
      %c0_12 = arith.constant 0 : index
      %c0_13 = arith.constant 0 : index
      %14 = vector.load %arg5[%c0_12, %c0_13] : memref<1x128xf32, #tpu.memory_space<vmem>>, vector<1x128xf32>
      %15 = vector.broadcast %14 : vector<1x128xf32> to vector<64x128xf32>
      %16 = arith.addf %13, %15 : vector<64x128xf32>
      %c0_14 = arith.constant 0 : index
      %c0_15 = arith.constant 0 : index
      %17 = vector.load %arg6[%c0_14, %c0_15] : memref<64x128xf32, #tpu.memory_space<vmem>>, vector<64x128xf32>
      tpu.vector_store %arg6[%c0_14, %c0_15], %16 {strides = array<i32>} : memref<64x128xf32, #tpu.memory_space<vmem>>, vector<64x128xf32>,
    } else {
    }
    return
  }
  func.func @transform_0(%arg0: i32, %arg1: i32, %arg2: i32) -> (i32, i32) {
    %c0_i32 = arith.constant 0 : i32
    return %arg0, %arg2 : i32, i32
  }
  func.func @transform_1(%arg0: i32, %arg1: i32, %arg2: i32) -> (i32, i32) {
    %c0_i32 = arith.constant 0 : i32
    return %arg2, %arg1 : i32, i32
  }
  func.func @transform_2(%arg0: i32, %arg1: i32, %arg2: i32) -> (i32, i32) {
    %c0_i32 = arith.constant 0 : i32
    %c0_i32_0 = arith.constant 0 : i32
    return %c0_i32, %arg1 : i32, i32
  }
  func.func @transform_3(%arg0: i32, %arg1: i32, %arg2: i32) -> (i32, i32) {
    %c0_i32 = arith.constant 0 : i32
    return %arg0, %arg1 : i32, i32
  }
}

</mosaic_0001>

<llo_original>
// kernel: tpu_custom_call.1
$region0: #{tpu_custom_call.1}
  #allocation0 [shape = 'u32[]', space=smem, size = 0x4, offset = 0x4, fixed_abs, tag = 'smem constant byte address 0x4 - core index']
  #allocation1 [shape = 'u32[144,128]{1,0:T(1,128)}', space=vmem, size = 0x12000, scoped, tag = 'internal scratch']
  #allocation2 [shape = 'f32[64,128]{1,0:T(8,128)}', space=vmem, size = 0x8000, scoped, tag = 'scratch operand']
  %s0 = inlined_call_operand.hbm [shape: f32[64,128], index: 0, kind: input, shape index: {}]
  %s1 = inlined_call_operand.hbm [shape: bf16[128,128], index: 1, kind: input, shape index: {}]
  %s2 = inlined_call_operand.vmem [shape: f32[1,128], index: 2, kind: input, shape index: {}]
  %s3 = inlined_call_operand.hbm [shape: f32[64,128], index: 3, kind: output, shape index: {}]
  %s4 = sld [smem:[#allocation0]]
  $region38: #{tpu_custom_call.1} parent=0
    _
  %s6 = ssub.s32 1, %s4
  %s7 = scalar_select 0, %s6, %s4
  $region1: #{tpu_custom_call.1} parent=0
    #allocation3 [shape = 'u8[32768]{0}', space=vmem, size = 0x8000, scoped, tag = 'input window, operand 0, single buffered']
    #allocation4 [shape = 's32[1]{0}', space=sflag, size = 0x4, scoped, tag = 'scoped memory for tpu_custom_call.1']
    #allocation5 [shape = 's32[1]{0}', space=sflag, size = 0x4, scoped, tag = 'scoped memory for tpu_custom_call.1']
    #allocation6 [shape = 'u8[32768]{0}', space=vmem, size = 0x8000, scoped, tag = 'input window, operand 1, single buffered']
    #allocation7 [shape = 's32[1]{0}', space=sflag, size = 0x4, scoped, tag = 'scoped memory for tpu_custom_call.1']
    #allocation8 [shape = 'u8[32768]{0}', space=vmem, size = 0x8000, scoped, tag = 'output window, operand 0, single buffered']
    %8 = vsyncpa [#allocation4], 0
    %9 = vsyncpa [#allocation7], 0
    %10 = vsyncpa [#allocation5], 0
    // Predicated region
    $region2: #{tpu_custom_call.1} parent=1 // pred_check
      _
    $region3: #{tpu_custom_call.1} parent=1 // pred_check_branch
      %12 = sbr.rel (0) target = $region5
    $region4: #{tpu_custom_call.1} parent=1 // pred_region
      %s14 = ssub.s32 1024, 1024
      %15 = vsyncadd [#allocation4], %s14
      %s16 = sshll.u32 [#allocation3], 4
      %s17 = int_to_ptr.vmem [resolvable:$true] %s16
      %22 = dma.hbm_to_vmem [thread:$0]  %s0, 1024, %s17, [#allocation4], 128, 128, 8
    $region5: #{tpu_custom_call.1} parent=1 // pred_fallthru
      _
    // Predicated region
    $region6: #{tpu_custom_call.1} parent=1 // pred_check
      _
    $region7: #{tpu_custom_call.1} parent=1 // pred_check_branch
      %24 = sbr.rel (0) target = $region9
    $region8: #{tpu_custom_call.1} parent=1 // pred_region
      %s26 = ssub.s32 1024, 1024
      %27 = vsyncadd [#allocation7], %s26
      %s28 = sshll.u32 [#allocation6], 4
      %s29 = int_to_ptr.vmem [resolvable:$true] %s28
      %34 = dma.hbm_to_vmem [thread:$0]  %s1, 1024, %s29, [#allocation7], 64, 64, 4
    $region9: #{tpu_custom_call.1} parent=1 // pred_fallthru
      _
    // Predicated region
    $region10: #{tpu_custom_call.1} parent=1 // pred_check
      _
    $region11: #{tpu_custom_call.1} parent=1 // pred_check_branch
      %36 = sbr.rel (0) target = $region13
    $region12: #{tpu_custom_call.1} parent=1 // pred_region
      _
    $region13: #{tpu_custom_call.1} parent=1 // pred_fallthru
      _
    // Predicated region
    $region14: #{tpu_custom_call.1} parent=1 // pred_check
      _
    $region15: #{tpu_custom_call.1} parent=1 // pred_check_branch
      %38 = sbr.rel (0) target = $region17
    $region16: #{tpu_custom_call.1} parent=1 // pred_region
      %39 = dma.done [#allocation4], 1024
    $region17: #{tpu_custom_call.1} parent=1 // pred_fallthru
      _
    // Predicated region
    $region18: #{tpu_custom_call.1} parent=1 // pred_check
      _
    $region19: #{tpu_custom_call.1} parent=1 // pred_check_branch
      %41 = sbr.rel (0) target = $region21
    $region20: #{tpu_custom_call.1} parent=1 // pred_region
      %42 = dma.done [#allocation7], 1024
    $region21: #{tpu_custom_call.1} parent=1 // pred_fallthru
      _
    %p44 = scmp.eq.s32.totalorder 0, 0
    // Predicated region
    $region22: #{tpu_custom_call.1} parent=1 // pred_check
      %p45 = pneg %p44
    $region23: #{tpu_custom_call.1} parent=1 // pred_check_branch
      %47 = sbr.rel (%p45) target = $region25
    $region24: #{tpu_custom_call.1} parent=1 // pred_region
      %48 = vst [vmem:[#allocation2] sm:$0xff] 0.0
      %49 = vst [vmem:[#allocation2 + $0x8] sm:$0xff] 0.0
      %50 = vst [vmem:[#allocation2 + $0x10] sm:$0xff] 0.0
      %51 = vst [vmem:[#allocation2 + $0x18] sm:$0xff] 0.0
      %52 = vst [vmem:[#allocation2 + $0x20] sm:$0xff] 0.0
      %53 = vst [vmem:[#allocation2 + $0x28] sm:$0xff] 0.0
      %54 = vst [vmem:[#allocation2 + $0x30] sm:$0xff] 0.0
      %55 = vst [vmem:[#allocation2 + $0x38] sm:$0xff] 0.0
    $region25: #{tpu_custom_call.1} parent=1 // pred_fallthru
      _
    %v56 = vld [vmem:[#allocation2] sm:$0xff]
    %v57 = vld [vmem:[#allocation2 + $0x8] sm:$0xff]
    %v58 = vld [vmem:[#allocation2 + $0x10] sm:$0xff]
    %v59 = vld [vmem:[#allocation2 + $0x18] sm:$0xff]
    %v60 = vld [vmem:[#allocation2 + $0x20] sm:$0xff]
    %v61 = vld [vmem:[#allocation2 + $0x28] sm:$0xff]
    %v62 = vld [vmem:[#allocation2 + $0x30] sm:$0xff]
    %v63 = vld [vmem:[#allocation2 + $0x38] sm:$0xff]
    %v64 = vld [vmem:[#allocation3] sm:$0xff]
    %v65 = vld [vmem:[#allocation3 + $0x8] sm:$0xff]
    %v66 = vld [vmem:[#allocation3 + $0x10] sm:$0xff]
    %v67 = vld [vmem:[#allocation3 + $0x18] sm:$0xff]
    %v68 = vld [vmem:[#allocation3 + $0x20] sm:$0xff]
    %v69 = vld [vmem:[#allocation3 + $0x28] sm:$0xff]
    %v70 = vld [vmem:[#allocation3 + $0x30] sm:$0xff]
    %v71 = vld [vmem:[#allocation3 + $0x38] sm:$0xff]
    %v72 = vpack.c.bf16 %v65, %v64
    %v73 = vpack.c.bf16 %v67, %v66
    %v74 = vpack.c.bf16 %v69, %v68
    %v75 = vpack.c.bf16 %v71, %v70
    %v76 = vld [vmem:[#allocation6] sm:$0xf]
    %v77 = vld [vmem:[#allocation6 + $0x4] sm:$0xf]
    %v78 = vld [vmem:[#allocation6 + $0x8] sm:$0xf]
    %v79 = vld [vmem:[#allocation6 + $0xc] sm:$0xf]
    %v80 = vld [vmem:[#allocation6 + $0x10] sm:$0xf]
    %v81 = vld [vmem:[#allocation6 + $0x14] sm:$0xf]
    %v82 = vld [vmem:[#allocation6 + $0x18] sm:$0xf]
    %v83 = vld [vmem:[#allocation6 + $0x1c] sm:$0xf]
    %v84 = vld [vmem:[#allocation6 + $0x20] sm:$0xf]
    %v85 = vld [vmem:[#allocation6 + $0x24] sm:$0xf]
    %v86 = vld [vmem:[#allocation6 + $0x28] sm:$0xf]
    %v87 = vld [vmem:[#allocation6 + $0x2c] sm:$0xf]
    %v88 = vld [vmem:[#allocation6 + $0x30] sm:$0xf]
    %v89 = vld [vmem:[#allocation6 + $0x34] sm:$0xf]
    %v90 = vld [vmem:[#allocation6 + $0x38] sm:$0xf]
    %v91 = vld [vmem:[#allocation6 + $0x3c] sm:$0xf]
    %v108 = vunpack.c.l.b16 %v76
    %v109 = vunpack.c.l.b16 %v77
    %v110 = vunpack.c.l.b16 %v78
    %v111 = vunpack.c.l.b16 %v79
    %v112 = vunpack.c.l.b16 %v80
    %v113 = vunpack.c.l.b16 %v81
    %v114 = vunpack.c.l.b16 %v82
    %v115 = vunpack.c.l.b16 %v83
    %v116 = vunpack.c.l.b16 %v84
    %v117 = vunpack.c.l.b16 %v85
    %v118 = vunpack.c.l.b16 %v86
    %v119 = vunpack.c.l.b16 %v87
    %v120 = vunpack.c.l.b16 %v88
    %v121 = vunpack.c.l.b16 %v89
    %v122 = vunpack.c.l.b16 %v90
    %v123 = vunpack.c.l.b16 %v91
    %v124 = vpack.c.b16 %v109, %v108
    %v125 = vpack.c.b16 %v111, %v110
    %v126 = vpack.c.b16 %v113, %v112
    %v127 = vpack.c.b16 %v115, %v114
    %v128 = vpack.c.b16 %v117, %v116
    %v129 = vpack.c.b16 %v119, %v118
    %v130 = vpack.c.b16 %v121, %v120
    %v131 = vpack.c.b16 %v123, %v122
    %140 = vmatprep.subr.bf16.mxu0 0
    %141 = vmatpush1.bf16.msra.mxu0 %v124
    %142 = vmatprep.subr.bf16.mxu0 0
    %143 = vmatpush1.bf16.msra.mxu0 %v125
    %144 = vmatprep.subr.bf16.mxu0 0
    %145 = vmatpush1.bf16.msra.mxu0 %v126
    %146 = vmatprep.subr.bf16.mxu0 0
    %147 = vmatpush1.bf16.msra.mxu0 %v127
    %148 = vmatprep.subr.bf16.mxu0 0
    %149 = vmatpush1.bf16.msra.mxu0 %v128
    %150 = vmatprep.subr.bf16.mxu0 0
    %151 = vmatpush1.bf16.msra.mxu0 %v129
    %152 = vmatprep.subr.bf16.mxu0 0
    %153 = vmatpush1.bf16.msra.mxu0 %v130
    %154 = vmatprep.subr.bf16.mxu0 0
    %155 = vmatpush1.bf16.msra.mxu0 %v131
    %156 = vmatprep.subr.bf16.mxu0 0
    %157 = vmatpush1.bf16.msra.mxu0 0
    %158 = vmatprep.subr.bf16.mxu0 0
    %159 = vmatpush1.bf16.msra.mxu0 0
    %160 = vmatprep.subr.bf16.mxu0 0
    %161 = vmatpush1.bf16.msra.mxu0 0
    %162 = vmatprep.subr.bf16.mxu0 0
    %163 = vmatpush1.bf16.msra.mxu0 0
    %164 = vmatprep.subr.bf16.mxu0 0
    %165 = vmatpush1.bf16.msra.mxu0 0
    %166 = vmatprep.subr.bf16.mxu0 0
    %167 = vmatpush1.bf16.msra.mxu0 0
    %168 = vmatprep.subr.bf16.mxu0 0
    %169 = vmatpush1.bf16.msra.mxu0 0
    %170 = vmatprep.subr.bf16.mxu0 0
    %171 = vmatpush1.bf16.msra.mxu0 0
    %172 = vmatprep.mubr.bf16.mxu0 0
    %173 = vmatmul.mubr.bf16.gmra.mrb[0].mxu0 %v72
    %v174 = vpop.f32.mrb[0].mxu0
    %v175 = vadd.f32 0.0, %v174
    %v176 = vpop.f32.mrb[0].mxu0
    %v177 = vpop.f32.mrb[0].mxu0
    %v178 = vadd.f32 0.0, %v177
    %v179 = vpop.f32.mrb[0].mxu0
    %180 = vmatprep.mubr.bf16.mxu0 0
    %181 = vmatmul.mubr.bf16.gmra.mrb[0].mxu0 %v73
    %v182 = vpop.f32.mrb[0].mxu0
    %v183 = vadd.f32 0.0, %v182
    %v184 = vpop.f32.mrb[0].mxu0
    %v185 = vpop.f32.mrb[0].mxu0
    %v186 = vadd.f32 0.0, %v185
    %v187 = vpop.f32.mrb[0].mxu0
    %188 = vmatprep.mubr.bf16.mxu0 0
    %189 = vmatmul.mubr.bf16.gmra.mrb[0].mxu0 %v74
    %v190 = vpop.f32.mrb[0].mxu0
    %v191 = vadd.f32 0.0, %v190
    %v192 = vpop.f32.mrb[0].mxu0
    %v193 = vpop.f32.mrb[0].mxu0
    %v194 = vadd.f32 0.0, %v193
    %v195 = vpop.f32.mrb[0].mxu0
    %196 = vmatprep.mubr.bf16.mxu0 0
    %197 = vmatmul.mubr.bf16.gmra.mrb[0].mxu0 %v75
    %v198 = vpop.f32.mrb[0].mxu0
    %v199 = vadd.f32 0.0, %v198
    %v200 = vpop.f32.mrb[0].mxu0
    %v201 = vpop.f32.mrb[0].mxu0
    %v202 = vadd.f32 0.0, %v201
    %v203 = vpop.f32.mrb[0].mxu0
    %204 = vdwg.mxu0
    %v205 = vadd.f32 %v56, %v175
    %v206 = vadd.f32 %v57, %v178
    %v207 = vadd.f32 %v58, %v183
    %v208 = vadd.f32 %v59, %v186
    %v209 = vadd.f32 %v60, %v191
    %v210 = vadd.f32 %v61, %v194
    %v211 = vadd.f32 %v62, %v199
    %v212 = vadd.f32 %v63, %v202
    %213 = vst [vmem:[#allocation2] sm:$0xff] %v205
    %214 = vst [vmem:[#allocation2 + $0x8] sm:$0xff] %v206
    %215 = vst [vmem:[#allocation2 + $0x10] sm:$0xff] %v207
    %216 = vst [vmem:[#allocation2 + $0x18] sm:$0xff] %v208
    %217 = vst [vmem:[#allocation2 + $0x20] sm:$0xff] %v209
    %218 = vst [vmem:[#allocation2 + $0x28] sm:$0xff] %v210
    %219 = vst [vmem:[#allocation2 + $0x30] sm:$0xff] %v211
    %220 = vst [vmem:[#allocation2 + $0x38] sm:$0xff] %v212
    // Predicated region
    $region26: #{tpu_custom_call.1} parent=1 // pred_check
      %p221 = pneg %p44
    $region27: #{tpu_custom_call.1} parent=1 // pred_check_branch
      %223 = sbr.rel (%p221) target = $region29
    $region28: #{tpu_custom_call.1} parent=1 // pred_region
      %v224 = vld [vmem:[#allocation2] sm:$0xff]
      %v225 = vld [vmem:[#allocation2 + $0x8] sm:$0xff]
      %v226 = vld [vmem:[#allocation2 + $0x10] sm:$0xff]
      %v227 = vld [vmem:[#allocation2 + $0x18] sm:$0xff]
      %v228 = vld [vmem:[#allocation2 + $0x20] sm:$0xff]
      %v229 = vld [vmem:[#allocation2 + $0x28] sm:$0xff]
      %v230 = vld [vmem:[#allocation2 + $0x30] sm:$0xff]
      %v231 = vld [vmem:[#allocation2 + $0x38] sm:$0xff]
      %v232 = vld [vmem:[%s2] sm:$0x1]
      %v234 = vlaneseq
      %v235 = vshrl.u32 %v234, 7
      %v236 = vsub.s32 0, %v235
      %v237 = vrot.slane %v232, %v236
      %v239 = vadd.f32 %v224, %v237
      %v240 = vadd.f32 %v225, %v237
      %v241 = vadd.f32 %v226, %v237
      %v242 = vadd.f32 %v227, %v237
      %v243 = vadd.f32 %v228, %v237
      %v244 = vadd.f32 %v229, %v237
      %v245 = vadd.f32 %v230, %v237
      %v246 = vadd.f32 %v231, %v237
      %247 = vst [vmem:[#allocation8] sm:$0xff] %v239
      %248 = vst [vmem:[#allocation8 + $0x8] sm:$0xff] %v240
      %249 = vst [vmem:[#allocation8 + $0x10] sm:$0xff] %v241
      %250 = vst [vmem:[#allocation8 + $0x18] sm:$0xff] %v242
      %251 = vst [vmem:[#allocation8 + $0x20] sm:$0xff] %v243
      %252 = vst [vmem:[#allocation8 + $0x28] sm:$0xff] %v244
      %253 = vst [vmem:[#allocation8 + $0x30] sm:$0xff] %v245
      %254 = vst [vmem:[#allocation8 + $0x38] sm:$0xff] %v246
    $region29: #{tpu_custom_call.1} parent=1 // pred_fallthru
      _
    // Predicated region
    $region30: #{tpu_custom_call.1} parent=1 // pred_check
      _
    $region31: #{tpu_custom_call.1} parent=1 // pred_check_branch
      %256 = sbr.rel (0) target = $region33
    $region32: #{tpu_custom_call.1} parent=1 // pred_region
      %s258 = ssub.s32 1024, 1024
      %259 = vsyncadd [#allocation5], %s258
      %s260 = sshll.u32 [#allocation8], 4
      %s261 = int_to_ptr.vmem [resolvable:$true] %s260
      %266 = dma.vmem_to_hbm [thread:$0]  %s261, 1024, %s3, [#allocation5], 128, 128, 8
    $region33: #{tpu_custom_call.1} parent=1 // pred_fallthru
      _
    // Predicated region
    $region34: #{tpu_custom_call.1} parent=1 // pred_check
      _
    $region35: #{tpu_custom_call.1} parent=1 // pred_check_branch
      %268 = sbr.rel (0) target = $region37
    $region36: #{tpu_custom_call.1} parent=1 // pred_region
      %269 = dma.done [#allocation5], 1024
    $region37: #{tpu_custom_call.1} parent=1 // pred_fallthru
      _
    %270 = vsyncpa [#allocation4], 1
    %271 = vsyncpa [#allocation7], 1
    %272 = vsyncpa [#allocation5], 1

</llo_original>
